<compile_context>
chip_gen: v7x
topology: tpu7x:2x2x1
jax: 0.10.0
libtpu: 0.0.40
codegen_flags: <defaults>
</compile_context>

<pallas_src>
import numpy as np
import jax
import jax.numpy as jnp
from jax.experimental import pallas as pl
from jax.experimental.pallas import tpu as pltpu


def _round_up(x, m):
    return (x + m - 1) // m * m


def residual_mlp_kernel(x_ref, xres_ref, wt_ref, shift_ref, o_ref):
    # x_ref:     (tm, Dp)  f32  full input-feature slab (matmul operand, re-used across j)
    # xres_ref:  (tm, tn)  f32  residual slice of x for this feature tile
    # wt_ref:    (Dp, tn)  bf16 scale-folded W^T slab for this feature tile
    # shift_ref: (1,  tn)  f32  folded BN shift
    # o_ref:     (tm, tn)  f32
    xb = x_ref[...].astype(jnp.bfloat16)                         # bf16 MXU operand
    z = jnp.dot(xb, wt_ref[...], preferred_element_type=jnp.float32)
    bn = z + shift_ref[...]                                      # BN scale already in weight
    # Dropout: identity in eval mode. Residual add in f32 against original x, then ReLU.
    o_ref[...] = jnp.maximum(bn + xres_ref[...], 0.0).astype(o_ref.dtype)


def residual_mlp_block(x, w, gamma, beta, running_mean, running_var, eps=1e-5,
                       tile_m=None, tile_n=None):
    """x: [N, D] float32; w: [D, D] (PyTorch nn.Linear weight layout, [out, in])."""
    N, D = x.shape

    # --- fold BN (eval) into weight columns and a per-feature shift (wrapper-side glue) ---
    scale = gamma / jnp.sqrt(running_var + eps)                  # [D]
    shift = (beta - running_mean * scale).astype(jnp.float32)    # [D]
    wt = jnp.asarray(w, jnp.float32).T * scale[None, :]          # [D_in, D_out], scale folded

    # --- tile / padding plan: lane-dense (multiple-of-128) features, pipelined batch tiles ---
    Dp = _round_up(D, 128)
    if tile_n is None:
        for t in (512, 256, 128):
            if Dp % t == 0:
                tile_n = t
                break
    if tile_m is None:
        tile_m = min(256, _round_up(N, 8))
    Np = _round_up(N, tile_m)

    xf = jnp.asarray(x, jnp.float32)
    x_pad = jnp.pad(xf, ((0, Np - N), (0, Dp - D)))
    wt_pad = jnp.pad(wt, ((0, Dp - D), (0, Dp - D))).astype(jnp.bfloat16)
    shift_pad = jnp.pad(shift, (0, Dp - D)).reshape(1, Dp)

    grid = (Np // tile_m, Dp // tile_n)
    flops = 2 * Np * Dp * Dp
    bytes_accessed = (x_pad.size * 4 * 2          # x read for matmul + residual (f32)
                      + wt_pad.size * 2           # bf16 weight
                      + shift_pad.size * 4
                      + Np * Dp * 4)              # f32 output

    out = pl.pallas_call(
        residual_mlp_kernel,
        out_shape=jax.ShapeDtypeStruct((Np, Dp), jnp.float32),
        grid_spec=pltpu.PrefetchScalarGridSpec(
            num_scalar_prefetch=0,
            grid=grid,
            in_specs=[
                pl.BlockSpec((tile_m, Dp), lambda i, j: (i, 0)),       # x rows (full D_in)
                pl.BlockSpec((tile_m, tile_n), lambda i, j: (i, j)),   # x residual slice (f32)
                pl.BlockSpec((Dp, tile_n), lambda i, j: (0, j)),       # W^T slab (bf16)
                pl.BlockSpec((1, tile_n), lambda i, j: (0, j)),        # BN shift
            ],
            out_specs=pl.BlockSpec((tile_m, tile_n), lambda i, j: (i, j)),
        ),
        compiler_params=pltpu.CompilerParams(
            dimension_semantics=("parallel", "parallel")),
        cost_estimate=pl.CostEstimate(
            flops=flops, transcendentals=0, bytes_accessed=bytes_accessed),
    )(x_pad, x_pad, wt_pad, shift_pad)

    return out[:N, :D].astype(x.dtype)


def reference(x, w, gamma, beta, running_mean, running_var, eps=1e-5):
    z = x @ w.T
    bn = (z - running_mean) / jnp.sqrt(running_var + eps) * gamma + beta
    return jnp.maximum(bn + x, 0.0)


if __name__ == "__main__":
    N, D = 8, 32  # batch=8, dim=32
    key = jax.random.PRNGKey(0)
    kx, kw, kg, kb, km, kv = jax.random.split(key, 6)

    x = jax.random.normal(kx, (N, D), dtype=jnp.float32)
    # nn.Linear(dim, dim, bias=False): weight [D, D]
    w = jax.random.uniform(kw, (D, D), minval=-1.0, maxval=1.0, dtype=jnp.float32) / jnp.sqrt(D)
    # BatchNorm1d(dim) parameters / running stats (deterministic, non-trivial)
    gamma = 1.0 + 0.1 * jax.random.normal(kg, (D,), dtype=jnp.float32)
    beta = 0.1 * jax.random.normal(kb, (D,), dtype=jnp.float32)
    running_mean = 0.1 * jax.random.normal(km, (D,), dtype=jnp.float32)
    running_var = 1.0 + 0.1 * jnp.abs(jax.random.normal(kv, (D,), dtype=jnp.float32))

    out = residual_mlp_block(x, w, gamma, beta, running_mean, running_var)
    out = jax.block_until_ready(out)

    ref = reference(x, w, gamma, beta, running_mean, running_var)
    # Tolerance reflects the bf16 MXU operands (f32 accumulation) vs the pure-f32 reference.
    np.testing.assert_allclose(np.asarray(out), np.asarray(ref), rtol=5e-2, atol=5e-2)
    print("KERNEL_OK")
</pallas_src>

<mosaic_0001>
module attributes {stable_mosaic.version = 11 : i64} {
  func.func @residual_mlp_kernel(%arg0: i32, %arg1: i32, %arg2: memref<8x128xf32, #tpu.memory_space<vmem>>, %arg3: memref<8x128xf32, #tpu.memory_space<vmem>>, %arg4: memref<128x128xbf16, #tpu.memory_space<vmem>>, %arg5: memref<1x128xf32, #tpu.memory_space<vmem>>, %arg6: memref<8x128xf32, #tpu.memory_space<vmem>>) attributes {dimension_semantics = [#tpu.dimension_semantics<parallel>, #tpu.dimension_semantics<parallel>], iteration_bounds = array<i64: 1, 1>, scalar_prefetch = 0 : i64, scratch_operands = 0 : i64, tpu.core_type = #tpu.core_type<tc>, window_params = [{transform_indices = @transform_0, window_bounds = array<i64: 8, 128>}, {transform_indices = @transform_1, window_bounds = array<i64: 8, 128>}, {transform_indices = @transform_2, window_bounds = array<i64: 128, 128>}, {transform_indices = @transform_3, window_bounds = array<i64: 1, 128>}, {transform_indices = @transform_4, window_bounds = array<i64: 8, 128>}]} {
    %c0 = arith.constant 0 : index
    %c0_0 = arith.constant 0 : index
    %0 = vector.load %arg2[%c0, %c0_0] : memref<8x128xf32, #tpu.memory_space<vmem>>, vector<8x128xf32>
    %1 = arith.truncf %0 : vector<8x128xf32> to vector<8x128xbf16>
    %c0_1 = arith.constant 0 : index
    %c0_2 = arith.constant 0 : index
    %2 = vector.load %arg4[%c0_1, %c0_2] : memref<128x128xbf16, #tpu.memory_space<vmem>>, vector<128x128xbf16>
    %cst = arith.constant dense<0.000000e+00> : vector<8x128xf32>
    %3 = tpu.matmul %1, %2, %cst {dimension_numbers = #tpu.dot_dimension_numbers<[1], [0], [0], [1], [0, 0, 1, 1], [], []>} : vector<8x128xbf16>, vector<128x128xbf16>, vector<8x128xf32> -> vector<8x128xf32>
    %c0_3 = arith.constant 0 : index
    %c0_4 = arith.constant 0 : index
    %4 = vector.load %arg5[%c0_3, %c0_4] : memref<1x128xf32, #tpu.memory_space<vmem>>, vector<1x128xf32>
    %5 = vector.broadcast %4 : vector<1x128xf32> to vector<8x128xf32>
    %6 = arith.addf %3, %5 : vector<8x128xf32>
    %c0_5 = arith.constant 0 : index
    %c0_6 = arith.constant 0 : index
    %7 = vector.load %arg3[%c0_5, %c0_6] : memref<8x128xf32, #tpu.memory_space<vmem>>, vector<8x128xf32>
    %8 = arith.addf %6, %7 : vector<8x128xf32>
    %cst_7 = arith.constant 0.000000e+00 : f32
    %9 = vector.broadcast %cst_7 : f32 to vector<8x128xf32>
    %10 = arith.maximumf %8, %9 : vector<8x128xf32>
    %c0_8 = arith.constant 0 : index
    %c0_9 = arith.constant 0 : index
    %11 = vector.load %arg6[%c0_8, %c0_9] : memref<8x128xf32, #tpu.memory_space<vmem>>, vector<8x128xf32>
    tpu.vector_store %arg6[%c0_8, %c0_9], %10 {strides = array<i32>} : memref<8x128xf32, #tpu.memory_space<vmem>>, vector<8x128xf32>,
    return
  }
  func.func @transform_0(%arg0: i32, %arg1: i32) -> (i32, i32) {
    %c0_i32 = arith.constant 0 : i32
    %c0_i32_0 = arith.constant 0 : i32
    return %arg0, %c0_i32 : i32, i32
  }
  func.func @transform_1(%arg0: i32, %arg1: i32) -> (i32, i32) {
    %c0_i32 = arith.constant 0 : i32
    return %arg0, %arg1 : i32, i32
  }
  func.func @transform_2(%arg0: i32, %arg1: i32) -> (i32, i32) {
    %c0_i32 = arith.constant 0 : i32
    %c0_i32_0 = arith.constant 0 : i32
    return %c0_i32, %arg1 : i32, i32
  }
  func.func @transform_3(%arg0: i32, %arg1: i32) -> (i32, i32) {
    %c0_i32 = arith.constant 0 : i32
    %c0_i32_0 = arith.constant 0 : i32
    return %c0_i32, %arg1 : i32, i32
  }
  func.func @transform_4(%arg0: i32, %arg1: i32) -> (i32, i32) {
    %c0_i32 = arith.constant 0 : i32
    return %arg0, %arg1 : i32, i32
  }
}

</mosaic_0001>

<llo_original>
// kernel: tpu_custom_call.1
$region0: #{tpu_custom_call.1}
  #allocation0 [shape = 'u32[]', space=smem, size = 0x4, offset = 0x4, fixed_abs, tag = 'smem constant byte address 0x4 - core index']
  #allocation1 [shape = 'u32[144,128]{1,0:T(1,128)}', space=vmem, size = 0x12000, scoped, tag = 'internal scratch']
  %s0 = inlined_call_operand.hbm [shape: f32[8,128], index: 0, kind: input, shape index: {}]
  %s1 = inlined_call_operand.hbm [shape: f32[8,128], index: 1, kind: input, shape index: {}]
  %s2 = inlined_call_operand.hbm [shape: bf16[128,128], index: 2, kind: input, shape index: {}]
  %s3 = inlined_call_operand.vmem [shape: f32[1,128], index: 3, kind: input, shape index: {}]
  %s4 = inlined_call_operand.hbm [shape: f32[8,128], index: 4, kind: output, shape index: {}]
  %s5 = sld [smem:[#allocation0]]
  $region38: #{tpu_custom_call.1} parent=0
    _
  %s7 = ssub.s32 1, %s5
  %s8 = scalar_select 0, %s7, %s5
  $region1: #{tpu_custom_call.1} parent=0
    #allocation2 [shape = 'u8[4096]{0}', space=vmem, size = 0x1000, scoped, tag = 'input window, operand 0, single buffered']
    #allocation3 [shape = 's32[1]{0}', space=sflag, size = 0x4, scoped, tag = 'scoped memory for tpu_custom_call.1']
    #allocation4 [shape = 's32[1]{0}', space=sflag, size = 0x4, scoped, tag = 'scoped memory for tpu_custom_call.1']
    #allocation5 [shape = 'u8[4096]{0}', space=vmem, size = 0x1000, scoped, tag = 'input window, operand 1, single buffered']
    #allocation6 [shape = 's32[1]{0}', space=sflag, size = 0x4, scoped, tag = 'scoped memory for tpu_custom_call.1']
    #allocation7 [shape = 'u8[32768]{0}', space=vmem, size = 0x8000, scoped, tag = 'input window, operand 2, single buffered']
    #allocation8 [shape = 'u8[4096]{0}', space=vmem, size = 0x1000, scoped, tag = 'output window, operand 0, single buffered']
    %9 = vsyncpa [#allocation3], 0
    %10 = vsyncpa [#allocation6], 0
    %11 = vsyncpa [#allocation4], 0
    // Predicated region
    $region2: #{tpu_custom_call.1} parent=1 // pred_check
      _
    $region3: #{tpu_custom_call.1} parent=1 // pred_check_branch
      %13 = sbr.rel (0) target = $region5
    $region4: #{tpu_custom_call.1} parent=1 // pred_region
      %s15 = ssub.s32 128, 128
      %16 = vsyncadd [#allocation3], %s15
      %s18 = sshll.u32 [#allocation2], 4
      %s19 = int_to_ptr.vmem [resolvable:$true] %s18
      %21 = dma.hbm_to_vmem [thread:$0]  %s0, 128, %s19, [#allocation3]
    $region5: #{tpu_custom_call.1} parent=1 // pred_fallthru
      _
    // Predicated region
    $region6: #{tpu_custom_call.1} parent=1 // pred_check
      _
    $region7: #{tpu_custom_call.1} parent=1 // pred_check_branch
      %23 = sbr.rel (0) target = $region9
    $region8: #{tpu_custom_call.1} parent=1 // pred_region
      %s25 = ssub.s32 128, 128
      %26 = vsyncadd [#allocation6], %s25
      %s28 = sshll.u32 [#allocation5], 4
      %s29 = int_to_ptr.vmem [resolvable:$true] %s28
      %31 = dma.hbm_to_vmem [thread:$0]  %s1, 128, %s29, [#allocation6]
    $region9: #{tpu_custom_call.1} parent=1 // pred_fallthru
      _
    // Predicated region
    $region10: #{tpu_custom_call.1} parent=1 // pred_check
      _
    $region11: #{tpu_custom_call.1} parent=1 // pred_check_branch
      %33 = sbr.rel (0) target = $region13
    $region12: #{tpu_custom_call.1} parent=1 // pred_region
      %s35 = ssub.s32 1024, 1024
      %36 = vsyncadd [#allocation6], %s35
      %s37 = sshll.u32 [#allocation7], 4
      %s38 = int_to_ptr.vmem [resolvable:$true] %s37
      %43 = dma.hbm_to_vmem [thread:$0]  %s2, 1024, %s38, [#allocation6], 64, 64, 4
    $region13: #{tpu_custom_call.1} parent=1 // pred_fallthru
      _
    // Predicated region
    $region14: #{tpu_custom_call.1} parent=1 // pred_check
      _
    $region15: #{tpu_custom_call.1} parent=1 // pred_check_branch
      %45 = sbr.rel (0) target = $region17
    $region16: #{tpu_custom_call.1} parent=1 // pred_region
      _
    $region17: #{tpu_custom_call.1} parent=1 // pred_fallthru
      _
    // Predicated region
    $region18: #{tpu_custom_call.1} parent=1 // pred_check
      _
    $region19: #{tpu_custom_call.1} parent=1 // pred_check_branch
      %47 = sbr.rel (0) target = $region21
    $region20: #{tpu_custom_call.1} parent=1 // pred_region
      %48 = dma.done [#allocation3], 128
    $region21: #{tpu_custom_call.1} parent=1 // pred_fallthru
      _
    // Predicated region
    $region22: #{tpu_custom_call.1} parent=1 // pred_check
      _
    $region23: #{tpu_custom_call.1} parent=1 // pred_check_branch
      %50 = sbr.rel (0) target = $region25
    $region24: #{tpu_custom_call.1} parent=1 // pred_region
      %51 = dma.done [#allocation6], 128
    $region25: #{tpu_custom_call.1} parent=1 // pred_fallthru
      _
    // Predicated region
    $region26: #{tpu_custom_call.1} parent=1 // pred_check
      _
    $region27: #{tpu_custom_call.1} parent=1 // pred_check_branch
      %53 = sbr.rel (0) target = $region29
    $region28: #{tpu_custom_call.1} parent=1 // pred_region
      %54 = dma.done [#allocation6], 1024
    $region29: #{tpu_custom_call.1} parent=1 // pred_fallthru
      _
    %v56 = vld [vmem:[#allocation2] sm:$0xff]
    %v57 = vpack.c.bf16 %v56, %v56
    %v58 = vld [vmem:[#allocation7] sm:$0xf]
    %v59 = vld [vmem:[#allocation7 + $0x4] sm:$0xf]
    %v60 = vld [vmem:[#allocation7 + $0x8] sm:$0xf]
    %v61 = vld [vmem:[#allocation7 + $0xc] sm:$0xf]
    %v62 = vld [vmem:[#allocation7 + $0x10] sm:$0xf]
    %v63 = vld [vmem:[#allocation7 + $0x14] sm:$0xf]
    %v64 = vld [vmem:[#allocation7 + $0x18] sm:$0xf]
    %v65 = vld [vmem:[#allocation7 + $0x1c] sm:$0xf]
    %v66 = vld [vmem:[#allocation7 + $0x20] sm:$0xf]
    %v67 = vld [vmem:[#allocation7 + $0x24] sm:$0xf]
    %v68 = vld [vmem:[#allocation7 + $0x28] sm:$0xf]
    %v69 = vld [vmem:[#allocation7 + $0x2c] sm:$0xf]
    %v70 = vld [vmem:[#allocation7 + $0x30] sm:$0xf]
    %v71 = vld [vmem:[#allocation7 + $0x34] sm:$0xf]
    %v72 = vld [vmem:[#allocation7 + $0x38] sm:$0xf]
    %v73 = vld [vmem:[#allocation7 + $0x3c] sm:$0xf]
    %v74 = vld [vmem:[%s3] sm:$0x1]
    %v76 = vlaneseq
    %v77 = vshrl.u32 %v76, 7
    %v78 = vsub.s32 0, %v77
    %v79 = vrot.slane %v74, %v78
    %v97 = vunpack.c.l.b16 %v58
    %v98 = vunpack.c.l.b16 %v59
    %v99 = vunpack.c.l.b16 %v60
    %v100 = vunpack.c.l.b16 %v61
    %v101 = vunpack.c.l.b16 %v62
    %v102 = vunpack.c.l.b16 %v63
    %v103 = vunpack.c.l.b16 %v64
    %v104 = vunpack.c.l.b16 %v65
    %v105 = vunpack.c.l.b16 %v66
    %v106 = vunpack.c.l.b16 %v67
    %v107 = vunpack.c.l.b16 %v68
    %v108 = vunpack.c.l.b16 %v69
    %v109 = vunpack.c.l.b16 %v70
    %v110 = vunpack.c.l.b16 %v71
    %v111 = vunpack.c.l.b16 %v72
    %v112 = vunpack.c.l.b16 %v73
    %v113 = vpack.c.b16 %v98, %v97
    %v114 = vpack.c.b16 %v100, %v99
    %v115 = vpack.c.b16 %v102, %v101
    %v116 = vpack.c.b16 %v104, %v103
    %v117 = vpack.c.b16 %v106, %v105
    %v118 = vpack.c.b16 %v108, %v107
    %v119 = vpack.c.b16 %v110, %v109
    %v120 = vpack.c.b16 %v112, %v111
    %129 = vmatprep.subr.bf16.mxu0 0
    %130 = vmatpush1.bf16.msra.mxu0 %v113
    %131 = vmatprep.subr.bf16.mxu0 0
    %132 = vmatpush1.bf16.msra.mxu0 %v114
    %133 = vmatprep.subr.bf16.mxu0 0
    %134 = vmatpush1.bf16.msra.mxu0 %v115
    %135 = vmatprep.subr.bf16.mxu0 0
    %136 = vmatpush1.bf16.msra.mxu0 %v116
    %137 = vmatprep.subr.bf16.mxu0 0
    %138 = vmatpush1.bf16.msra.mxu0 %v117
    %139 = vmatprep.subr.bf16.mxu0 0
    %140 = vmatpush1.bf16.msra.mxu0 %v118
    %141 = vmatprep.subr.bf16.mxu0 0
    %142 = vmatpush1.bf16.msra.mxu0 %v119
    %143 = vmatprep.subr.bf16.mxu0 0
    %144 = vmatpush1.bf16.msra.mxu0 %v120
    %145 = vmatprep.subr.bf16.mxu0 0
    %146 = vmatpush1.bf16.msra.mxu0 0
    %147 = vmatprep.subr.bf16.mxu0 0
    %148 = vmatpush1.bf16.msra.mxu0 0
    %149 = vmatprep.subr.bf16.mxu0 0
    %150 = vmatpush1.bf16.msra.mxu0 0
    %151 = vmatprep.subr.bf16.mxu0 0
    %152 = vmatpush1.bf16.msra.mxu0 0
    %153 = vmatprep.subr.bf16.mxu0 0
    %154 = vmatpush1.bf16.msra.mxu0 0
    %155 = vmatprep.subr.bf16.mxu0 0
    %156 = vmatpush1.bf16.msra.mxu0 0
    %157 = vmatprep.subr.bf16.mxu0 0
    %158 = vmatpush1.bf16.msra.mxu0 0
    %159 = vmatprep.subr.bf16.mxu0 0
    %160 = vmatpush1.bf16.msra.mxu0 0
    %161 = vmatprep.mubr.bf16.mxu0 0
    %162 = vmatmul.mubr.bf16.gmra.mrb[0].mxu0 %v57
    %v163 = vpop.f32.mrb[0].mxu0
    %v164 = vadd.f32 %v79, %v163
    %v165 = vpop.f32.mrb[0].mxu0
    %v166 = vpop.f32.mrb[0].mxu0
    %v167 = vpop.f32.mrb[0].mxu0
    %168 = vdwg.mxu0
    %v169 = vld [vmem:[#allocation5] sm:$0xff]
    %v170 = vadd.f32 %v164, %v169
    %v171 = vmax.f32 %v170, 0.0
    %172 = vst [vmem:[#allocation8] sm:$0xff] %v171
    // Predicated region
    $region30: #{tpu_custom_call.1} parent=1 // pred_check
      _
    $region31: #{tpu_custom_call.1} parent=1 // pred_check_branch
      %174 = sbr.rel (0) target = $region33
    $region32: #{tpu_custom_call.1} parent=1 // pred_region
      %s176 = ssub.s32 128, 128
      %177 = vsyncadd [#allocation4], %s176
      %s179 = sshll.u32 [#allocation8], 4
      %s180 = int_to_ptr.vmem [resolvable:$true] %s179
      %182 = dma.vmem_to_hbm [thread:$0]  %s180, 128, %s4, [#allocation4]
    $region33: #{tpu_custom_call.1} parent=1 // pred_fallthru
      _
    // Predicated region
    $region34: #{tpu_custom_call.1} parent=1 // pred_check
      _
    $region35: #{tpu_custom_call.1} parent=1 // pred_check_branch
      %184 = sbr.rel (0) target = $region37
    $region36: #{tpu_custom_call.1} parent=1 // pred_region
      %185 = dma.done [#allocation4], 128
    $region37: #{tpu_custom_call.1} parent=1 // pred_fallthru
      _
    %186 = vsyncpa [#allocation3], 1
    %187 = vsyncpa [#allocation6], 1
    %188 = vsyncpa [#allocation4], 1

</llo_original>
